<compile_context>
chip_gen: v7x
topology: tpu7x:2x2x1
jax: 0.10.0
libtpu: 0.0.40
codegen_flags: <defaults>
</compile_context>

<pallas_src>
import jax
import jax.numpy as jnp
from jax.experimental import pallas as pl
from jax.experimental.pallas import tpu as pltpu


# ----------------------------------------------------------------------------
# Generation-aware VMEM budgets (tile budget, vmem_limit_bytes for Mosaic).
# ----------------------------------------------------------------------------
_VMEM_BUDGET = {
    "v7": (36 << 20, 48 << 20),  # 64 MiB physical per TC -> leave headroom
    "v6": (48 << 20, 64 << 20),  # 128 MiB physical
    "v5": (20 << 20, 28 << 20),  # v5e scoped default is 16 MiB; stay modest
    "unknown": (20 << 20, 28 << 20),
}


def _tpu_generation() -> str:
    try:
        kind = jax.devices()[0].device_kind.lower()
    except Exception:
        return "unknown"
    if "v7" in kind:
        return "v7"
    if "v6" in kind:
        return "v6"
    if "v5" in kind:
        return "v5"
    return "unknown"


def _round_up(x: int, m: int) -> int:
    return (x + m - 1) // m * m


def _largest_divisor_tile(dim: int, unit: int, cap: int) -> int:
    """Largest multiple of `unit` that divides `dim` and is <= cap (>= unit)."""
    cap = max(unit, min(cap, dim))
    best = unit
    for t in range(unit, cap + 1, unit):
        if dim % t == 0:
            best = t
    return best


def _pad2d(a, row_pad: int, col_pad: int):
    if row_pad == 0 and col_pad == 0:
        return a
    return jnp.pad(a, ((0, row_pad), (0, col_pad)))


def _plan_linear(M: int, K: int, N: int, itemsize: int, n_weights: int):
    """Pick padded dims + tile sizes for a (M,K)@(K,N) matmul with n_weights RHS."""
    gen = _tpu_generation()
    budget, vmem_limit = _VMEM_BUDGET[gen]

    M_pad = _round_up(max(M, 1), 16)      # bf16-friendly sublane packing
    K_pad = _round_up(K, 128)
    N_pad = _round_up(N, 128)

    tm = _largest_divisor_tile(M_pad, 16, 512)
    if gen == "v7" and M_pad >= 32 and (M_pad // tm) < 2:
        # v7x has 2 TensorCores: keep at least 2 parallel M blocks when possible.
        tm = _largest_divisor_tile(M_pad, 16, max(16, tm // 2))

    # -- Fast path: weights fully resident, grid over M only (no K loop). --
    fast_bytes = (2 * n_weights * K_pad * N_pad     # resident weights (dbl-buf worst case)
                  + 2 * tm * K_pad                  # x tiles (double-buffered)
                  + 2 * tm * N_pad) * itemsize      # out tiles (double-buffered)
    if fast_bytes <= budget:
        return dict(fast=True, M_pad=M_pad, K_pad=K_pad, N_pad=N_pad,
                    tm=tm, tn=N_pad, tk=K_pad, vmem_limit=vmem_limit)

    # -- General tiled path: big K/N blocks, f32 accumulators, K innermost. --
    tk = _largest_divisor_tile(K_pad, 128, 512)
    tn = _largest_divisor_tile(N_pad, 128, 512)

    def vmem_use(tm_):
        return ((2 * tm_ * tk + 2 * n_weights * tk * tn + 2 * tm_ * tn) * itemsize
                + n_weights * tm_ * tn * 4)

    while tm > 16 and vmem_use(tm) > budget:
        tm = _largest_divisor_tile(M_pad, 16, tm - 16)

    return dict(fast=False, M_pad=M_pad, K_pad=K_pad, N_pad=N_pad,
                tm=tm, tn=tn, tk=tk, vmem_limit=vmem_limit)


# ----------------------------------------------------------------------------
# Kernel bodies
# ----------------------------------------------------------------------------
def _gate_up_fast_kernel(x_ref, w1_ref, w3_ref, h_ref):
    # x: (tm, K), w1/w3: (K, N) resident, h: (tm, N).  No K loop, no scratch.
    g = jnp.dot(x_ref[...], w1_ref[...], preferred_element_type=jnp.float32)
    u = jnp.dot(x_ref[...], w3_ref[...], preferred_element_type=jnp.float32)
    h_ref[...] = (g * jax.nn.sigmoid(g) * u).astype(h_ref.dtype)


def _gate_up_tiled_kernel(x_ref, w1_ref, w3_ref, h_ref, acc1_ref, acc3_ref):
    k = pl.program_id(2)

    @pl.when(k == 0)
    def _():
        acc1_ref[...] = jnp.zeros_like(acc1_ref)
        acc3_ref[...] = jnp.zeros_like(acc3_ref)

    acc1_ref[...] += jnp.dot(x_ref[...], w1_ref[...], preferred_element_type=jnp.float32)
    acc3_ref[...] += jnp.dot(x_ref[...], w3_ref[...], preferred_element_type=jnp.float32)

    @pl.when(k == pl.num_programs(2) - 1)
    def _():
        g = acc1_ref[...]
        h_ref[...] = (g * jax.nn.sigmoid(g) * acc3_ref[...]).astype(h_ref.dtype)


def _linear_fast_kernel(x_ref, w_ref, o_ref):
    o_ref[...] = jnp.dot(x_ref[...], w_ref[...],
                         preferred_element_type=jnp.float32).astype(o_ref.dtype)


def _linear_tiled_kernel(x_ref, w_ref, o_ref, acc_ref):
    k = pl.program_id(2)

    @pl.when(k == 0)
    def _():
        acc_ref[...] = jnp.zeros_like(acc_ref)

    acc_ref[...] += jnp.dot(x_ref[...], w_ref[...], preferred_element_type=jnp.float32)

    @pl.when(k == pl.num_programs(2) - 1)
    def _():
        o_ref[...] = acc_ref[...].astype(o_ref.dtype)


# ----------------------------------------------------------------------------
# pallas_call wrappers
# ----------------------------------------------------------------------------
def _pallas_gate_up(x2d, w1_kn, w3_kn, out_dtype):
    """h = silu(x @ w1_kn) * (x @ w3_kn).  x2d: (M, K); w1_kn/w3_kn: (K, N)."""
    M, K = x2d.shape
    _, N = w1_kn.shape
    plan = _plan_linear(M, K, N, jnp.dtype(x2d.dtype).itemsize, n_weights=2)
    M_pad, K_pad, N_pad = plan["M_pad"], plan["K_pad"], plan["N_pad"]
    tm, tn, tk = plan["tm"], plan["tn"], plan["tk"]

    xp = _pad2d(x2d, M_pad - M, K_pad - K)
    w1p = _pad2d(w1_kn, K_pad - K, N_pad - N)
    w3p = _pad2d(w3_kn, K_pad - K, N_pad - N)

    if plan["fast"]:
        h = pl.pallas_call(
            _gate_up_fast_kernel,
            out_shape=jax.ShapeDtypeStruct((M_pad, N_pad), out_dtype),
            grid_spec=pltpu.PrefetchScalarGridSpec(
                num_scalar_prefetch=0,
                grid=(M_pad // tm,),
                in_specs=[
                    pl.BlockSpec((tm, K_pad), lambda i: (i, 0)),
                    pl.BlockSpec((K_pad, N_pad), lambda i: (0, 0)),  # weight resident
                    pl.BlockSpec((K_pad, N_pad), lambda i: (0, 0)),  # weight resident
                ],
                out_specs=pl.BlockSpec((tm, N_pad), lambda i: (i, 0)),
            ),
            compiler_params=pltpu.CompilerParams(
                dimension_semantics=("parallel",),
                vmem_limit_bytes=plan["vmem_limit"],
            ),
        )(xp, w1p, w3p)
    else:
        h = pl.pallas_call(
            _gate_up_tiled_kernel,
            out_shape=jax.ShapeDtypeStruct((M_pad, N_pad), out_dtype),
            grid_spec=pltpu.PrefetchScalarGridSpec(
                num_scalar_prefetch=0,
                grid=(M_pad // tm, N_pad // tn, K_pad // tk),
                in_specs=[
                    pl.BlockSpec((tm, tk), lambda i, j, k: (i, k)),
                    pl.BlockSpec((tk, tn), lambda i, j, k: (k, j)),
                    pl.BlockSpec((tk, tn), lambda i, j, k: (k, j)),
                ],
                out_specs=pl.BlockSpec((tm, tn), lambda i, j, k: (i, j)),
                scratch_shapes=[pltpu.VMEM((tm, tn), jnp.float32),
                                pltpu.VMEM((tm, tn), jnp.float32)],
            ),
            compiler_params=pltpu.CompilerParams(
                dimension_semantics=("parallel", "parallel", "arbitrary"),
                vmem_limit_bytes=plan["vmem_limit"],
            ),
        )(xp, w1p, w3p)

    return h[:M, :N]


def _pallas_linear(x2d, w_kn, out_dtype):
    """y = x @ w_kn.  x2d: (M, K); w_kn: (K, N) (pre-transposed weight)."""
    M, K = x2d.shape
    _, N = w_kn.shape
    plan = _plan_linear(M, K, N, jnp.dtype(x2d.dtype).itemsize, n_weights=1)
    M_pad, K_pad, N_pad = plan["M_pad"], plan["K_pad"], plan["N_pad"]
    tm, tn, tk = plan["tm"], plan["tn"], plan["tk"]

    xp = _pad2d(x2d, M_pad - M, K_pad - K)
    wp = _pad2d(w_kn, K_pad - K, N_pad - N)

    if plan["fast"]:
        y = pl.pallas_call(
            _linear_fast_kernel,
            out_shape=jax.ShapeDtypeStruct((M_pad, N_pad), out_dtype),
            grid_spec=pltpu.PrefetchScalarGridSpec(
                num_scalar_prefetch=0,
                grid=(M_pad // tm,),
                in_specs=[
                    pl.BlockSpec((tm, K_pad), lambda i: (i, 0)),
                    pl.BlockSpec((K_pad, N_pad), lambda i: (0, 0)),  # weight resident
                ],
                out_specs=pl.BlockSpec((tm, N_pad), lambda i: (i, 0)),
            ),
            compiler_params=pltpu.CompilerParams(
                dimension_semantics=("parallel",),
                vmem_limit_bytes=plan["vmem_limit"],
            ),
        )(xp, wp)
    else:
        y = pl.pallas_call(
            _linear_tiled_kernel,
            out_shape=jax.ShapeDtypeStruct((M_pad, N_pad), out_dtype),
            grid_spec=pltpu.PrefetchScalarGridSpec(
                num_scalar_prefetch=0,
                grid=(M_pad // tm, N_pad // tn, K_pad // tk),
                in_specs=[
                    pl.BlockSpec((tm, tk), lambda i, j, k: (i, k)),
                    pl.BlockSpec((tk, tn), lambda i, j, k: (k, j)),
                ],
                out_specs=pl.BlockSpec((tm, tn), lambda i, j, k: (i, j)),
                scratch_shapes=[pltpu.VMEM((tm, tn), jnp.float32)],
            ),
            compiler_params=pltpu.CompilerParams(
                dimension_semantics=("parallel", "parallel", "arbitrary"),
                vmem_limit_bytes=plan["vmem_limit"],
            ),
        )(xp, wp)

    return y[:M, :N]


# ----------------------------------------------------------------------------
# MLP forward (matches the PyTorch module with world_size == 1, bias=False)
# ----------------------------------------------------------------------------
def mlp_forward(x, w1, w2, w3):
    """y = w2( silu(w1(x)) * w3(x) )

    x : [..., dim]
    w1: (inter_dim, dim)   (torch (out, in) layout)
    w3: (inter_dim, dim)
    w2: (dim, inter_dim)
    """
    *lead, dim = x.shape
    M = 1
    for d in lead:
        M *= d
    x2d = x.reshape(M, dim)

    # One-time relayout of the persistent weights to (K, N) so the kernels
    # contract on natural dims (no per-step weight-tile transpose on the XLU).
    w1_kn = jnp.asarray(w1).T   # (dim, inter_dim)
    w3_kn = jnp.asarray(w3).T   # (dim, inter_dim)
    w2_kn = jnp.asarray(w2).T   # (inter_dim, dim)

    h = _pallas_gate_up(x2d, w1_kn, w3_kn, x.dtype)     # silu(x@w1.T) * (x@w3.T)
    y2d = _pallas_linear(h, w2_kn, x.dtype)             # @ w2.T  (world_size==1: no all_reduce)
    # TODO(synk): fp8 weight path (weight.element_size()==1 + block scales) not implemented.
    return y2d.reshape(*lead, dim)


if __name__ == "__main__":
    # MLP(dim=128, inter_dim=256), bf16 weights (the "weight.element_size() > 1" path).
    dim, inter_dim = 128, 256
    batch, seq = 2, 8

    key = jax.random.PRNGKey(0)
    kx, k1, k2, k3 = jax.random.split(key, 4)
    x = jax.random.normal(kx, (batch, seq, dim), dtype=jnp.float32).astype(jnp.bfloat16)
    w1 = (jax.random.normal(k1, (inter_dim, dim), dtype=jnp.float32)
          * (dim ** -0.5)).astype(jnp.bfloat16)
    w3 = (jax.random.normal(k3, (inter_dim, dim), dtype=jnp.float32)
          * (dim ** -0.5)).astype(jnp.bfloat16)
    w2 = (jax.random.normal(k2, (dim, inter_dim), dtype=jnp.float32)
          * (inter_dim ** -0.5)).astype(jnp.bfloat16)

    y = mlp_forward(x, w1, w2, w3)
    y = jax.block_until_ready(y)
    assert y.shape == (batch, seq, dim)

    # Plain-JAX f32 reference of the same forward pass.
    xf = x.astype(jnp.float32)
    g = xf @ w1.astype(jnp.float32).T
    u = xf @ w3.astype(jnp.float32).T
    h_ref = g * jax.nn.sigmoid(g) * u
    y_ref = h_ref @ w2.astype(jnp.float32).T

    err = float(jnp.max(jnp.abs(y.astype(jnp.float32) - y_ref)))
    assert err < 1e-1, f"max abs err {err}"

    print("KERNEL_OK")
</pallas_src>

<mosaic_0001>
module attributes {stable_mosaic.version = 11 : i64} {
  func.func @_gate_up_fast_kernel(%arg0: i32, %arg1: memref<16x128xbf16, #tpu.memory_space<vmem>>, %arg2: memref<128x256xbf16, #tpu.memory_space<vmem>>, %arg3: memref<128x256xbf16, #tpu.memory_space<vmem>>, %arg4: memref<16x256xbf16, #tpu.memory_space<vmem>>) attributes {dimension_semantics = [#tpu.dimension_semantics<parallel>], iteration_bounds = array<i64: 1>, scalar_prefetch = 0 : i64, scratch_operands = 0 : i64, tpu.core_type = #tpu.core_type<tc>, window_params = [{transform_indices = @transform_0, window_bounds = array<i64: 16, 128>}, {pipeline_mode = #tpu.pipeline_mode<synchronous>, transform_indices = @transform_1, window_bounds = array<i64: 128, 256>}, {pipeline_mode = #tpu.pipeline_mode<synchronous>, transform_indices = @transform_2, window_bounds = array<i64: 128, 256>}, {transform_indices = @transform_3, window_bounds = array<i64: 16, 256>}]} {
    %c0 = arith.constant 0 : index
    %c0_0 = arith.constant 0 : index
    %0 = vector.load %arg1[%c0, %c0_0] : memref<16x128xbf16, #tpu.memory_space<vmem>>, vector<16x128xbf16>
    %c0_1 = arith.constant 0 : index
    %c0_2 = arith.constant 0 : index
    %1 = vector.load %arg2[%c0_1, %c0_2] : memref<128x256xbf16, #tpu.memory_space<vmem>>, vector<128x256xbf16>
    %cst = arith.constant dense<0.000000e+00> : vector<16x256xf32>
    %2 = tpu.matmul %0, %1, %cst {dimension_numbers = #tpu.dot_dimension_numbers<[1], [0], [0], [1], [0, 0, 1, 1], [], []>} : vector<16x128xbf16>, vector<128x256xbf16>, vector<16x256xf32> -> vector<16x256xf32>
    %c0_3 = arith.constant 0 : index
    %c0_4 = arith.constant 0 : index
    %3 = vector.load %arg1[%c0_3, %c0_4] : memref<16x128xbf16, #tpu.memory_space<vmem>>, vector<16x128xbf16>
    %c0_5 = arith.constant 0 : index
    %c0_6 = arith.constant 0 : index
    %4 = vector.load %arg3[%c0_5, %c0_6] : memref<128x256xbf16, #tpu.memory_space<vmem>>, vector<128x256xbf16>
    %cst_7 = arith.constant dense<0.000000e+00> : vector<16x256xf32>
    %5 = tpu.matmul %3, %4, %cst_7 {dimension_numbers = #tpu.dot_dimension_numbers<[1], [0], [0], [1], [0, 0, 1, 1], [], []>} : vector<16x128xbf16>, vector<128x256xbf16>, vector<16x256xf32> -> vector<16x256xf32>
    %6 = arith.negf %2 : vector<16x256xf32>
    %7 = math.exp %6 : vector<16x256xf32>
    %cst_8 = arith.constant 1.000000e+00 : f32
    %8 = vector.broadcast %cst_8 : f32 to vector<16x256xf32>
    %9 = arith.addf %8, %7 : vector<16x256xf32>
    %10 = arith.divf %8, %9 : vector<16x256xf32>
    %11 = arith.mulf %2, %10 : vector<16x256xf32>
    %12 = arith.mulf %11, %5 : vector<16x256xf32>
    %13 = arith.truncf %12 : vector<16x256xf32> to vector<16x256xbf16>
    %c0_9 = arith.constant 0 : index
    %c0_10 = arith.constant 0 : index
    %14 = vector.load %arg4[%c0_9, %c0_10] : memref<16x256xbf16, #tpu.memory_space<vmem>>, vector<16x256xbf16>
    tpu.vector_store %arg4[%c0_9, %c0_10], %13 {strides = array<i32>} : memref<16x256xbf16, #tpu.memory_space<vmem>>, vector<16x256xbf16>,
    return
  }
  func.func @transform_0(%arg0: i32) -> (i32, i32) {
    %c0_i32 = arith.constant 0 : i32
    %c0_i32_0 = arith.constant 0 : i32
    return %arg0, %c0_i32 : i32, i32
  }
  func.func @transform_1(%arg0: i32) -> (i32, i32) {
    %c0_i32 = arith.constant 0 : i32
    %c0_i32_0 = arith.constant 0 : i32
    %c0_i32_1 = arith.constant 0 : i32
    return %c0_i32, %c0_i32_0 : i32, i32
  }
  func.func @transform_2(%arg0: i32) -> (i32, i32) {
    %c0_i32 = arith.constant 0 : i32
    %c0_i32_0 = arith.constant 0 : i32
    %c0_i32_1 = arith.constant 0 : i32
    return %c0_i32, %c0_i32_0 : i32, i32
  }
  func.func @transform_3(%arg0: i32) -> (i32, i32) {
    %c0_i32 = arith.constant 0 : i32
    %c0_i32_0 = arith.constant 0 : i32
    return %arg0, %c0_i32 : i32, i32
  }
}

</mosaic_0001>

<llo_original>
// kernel: tpu_custom_call.1
$region0: #{tpu_custom_call.1}
  #allocation0 [shape = 'u32[]', space=smem, size = 0x4, offset = 0x4, fixed_abs, tag = 'smem constant byte address 0x4 - core index']
  #allocation1 [shape = 'u32[144,128]{1,0:T(1,128)}', space=vmem, size = 0x12000, scoped, tag = 'internal scratch']
  %s0 = inlined_call_operand.hbm [shape: bf16[16,128], index: 0, kind: input, shape index: {}]
  %s1 = inlined_call_operand.hbm [shape: bf16[128,256], index: 1, kind: input, shape index: {}]
  %s2 = inlined_call_operand.hbm [shape: bf16[128,256], index: 2, kind: input, shape index: {}]
  %s3 = inlined_call_operand.hbm [shape: bf16[16,256], index: 3, kind: output, shape index: {}]
  %s4 = sld [smem:[#allocation0]]
  $region34: #{tpu_custom_call.1} parent=0
    _
  %s6 = ssub.s32 1, %s4
  %s7 = scalar_select 0, %s6, %s4
  $region1: #{tpu_custom_call.1} parent=0
    #allocation2 [shape = 'u8[4096]{0}', space=vmem, size = 0x1000, scoped, tag = 'input window, operand 0, single buffered']
    #allocation3 [shape = 's32[1]{0}', space=sflag, size = 0x4, scoped, tag = 'scoped memory for tpu_custom_call.1']
    #allocation4 [shape = 's32[1]{0}', space=sflag, size = 0x4, scoped, tag = 'scoped memory for tpu_custom_call.1']
    #allocation5 [shape = 'u8[65536]{0}', space=vmem, size = 0x10000, scoped, tag = 'input window, operand 1, single buffered']
    #allocation6 [shape = 's32[1]{0}', space=sflag, size = 0x4, scoped, tag = 'scoped memory for tpu_custom_call.1']
    #allocation7 [shape = 'u8[65536]{0}', space=vmem, size = 0x10000, scoped, tag = 'input window, operand 2, single buffered']
    #allocation8 [shape = 'u8[8192]{0}', space=vmem, size = 0x2000, scoped, tag = 'output window, operand 0, single buffered']
    %8 = vsyncpa [#allocation3], 0
    %9 = vsyncpa [#allocation6], 0
    %10 = vsyncpa [#allocation4], 0
    // Predicated region
    $region2: #{tpu_custom_call.1} parent=1 // pred_check
      _
    $region3: #{tpu_custom_call.1} parent=1 // pred_check_branch
      %12 = sbr.rel (0) target = $region5
    $region4: #{tpu_custom_call.1} parent=1 // pred_region
      %s14 = ssub.s32 128, 128
      %15 = vsyncadd [#allocation3], %s14
      %s16 = sshll.u32 [#allocation2], 4
      %s17 = int_to_ptr.vmem [resolvable:$true] %s16
      %22 = dma.hbm_to_vmem [thread:$0]  %s0, 128, %s17, [#allocation3], 64, 64, 4
    $region5: #{tpu_custom_call.1} parent=1 // pred_fallthru
      _
    // Predicated region
    $region6: #{tpu_custom_call.1} parent=1 // pred_check
      _
    $region7: #{tpu_custom_call.1} parent=1 // pred_check_branch
      %24 = sbr.rel (0) target = $region9
    $region8: #{tpu_custom_call.1} parent=1 // pred_region
      %s26 = ssub.s32 2048, 2048
      %27 = vsyncadd [#allocation6], %s26
      %s28 = sshll.u32 [#allocation5], 4
      %s29 = int_to_ptr.vmem [resolvable:$true] %s28
      %34 = dma.hbm_to_vmem [thread:$0]  %s1, 2048, %s29, [#allocation6], 128, 128, 8
    $region9: #{tpu_custom_call.1} parent=1 // pred_fallthru
      _
    // Predicated region
    $region10: #{tpu_custom_call.1} parent=1 // pred_check
      _
    $region11: #{tpu_custom_call.1} parent=1 // pred_check_branch
      %36 = sbr.rel (0) target = $region13
    $region12: #{tpu_custom_call.1} parent=1 // pred_region
      %s38 = ssub.s32 2048, 2048
      %39 = vsyncadd [#allocation6], %s38
      %s40 = sshll.u32 [#allocation7], 4
      %s41 = int_to_ptr.vmem [resolvable:$true] %s40
      %46 = dma.hbm_to_vmem [thread:$0]  %s2, 2048, %s41, [#allocation6], 128, 128, 8
    $region13: #{tpu_custom_call.1} parent=1 // pred_fallthru
      _
    // Predicated region
    $region14: #{tpu_custom_call.1} parent=1 // pred_check
      _
    $region15: #{tpu_custom_call.1} parent=1 // pred_check_branch
      %48 = sbr.rel (0) target = $region17
    $region16: #{tpu_custom_call.1} parent=1 // pred_region
      %49 = dma.done [#allocation3], 128
    $region17: #{tpu_custom_call.1} parent=1 // pred_fallthru
      _
    // Predicated region
    $region18: #{tpu_custom_call.1} parent=1 // pred_check
      _
    $region19: #{tpu_custom_call.1} parent=1 // pred_check_branch
      %51 = sbr.rel (0) target = $region21
    $region20: #{tpu_custom_call.1} parent=1 // pred_region
      %52 = dma.done [#allocation6], 2048
    $region21: #{tpu_custom_call.1} parent=1 // pred_fallthru
      _
    // Predicated region
    $region22: #{tpu_custom_call.1} parent=1 // pred_check
      _
    $region23: #{tpu_custom_call.1} parent=1 // pred_check_branch
      %54 = sbr.rel (0) target = $region25
    $region24: #{tpu_custom_call.1} parent=1 // pred_region
      %55 = dma.done [#allocation6], 2048
    $region25: #{tpu_custom_call.1} parent=1 // pred_fallthru
      _
    %v57 = vld [vmem:[#allocation2] sm:$0xf]
    %v58 = vld [vmem:[#allocation2 + $0x4] sm:$0xf]
    %v59 = vld [vmem:[#allocation5] sm:$0xff]
    %v60 = vld [vmem:[#allocation5 + $0x8] sm:$0xff]
    %v61 = vld [vmem:[#allocation5 + $0x10] sm:$0xff]
    %v62 = vld [vmem:[#allocation5 + $0x18] sm:$0xff]
    %v63 = vld [vmem:[#allocation5 + $0x20] sm:$0xff]
    %v64 = vld [vmem:[#allocation5 + $0x28] sm:$0xff]
    %v65 = vld [vmem:[#allocation5 + $0x30] sm:$0xff]
    %v66 = vld [vmem:[#allocation5 + $0x38] sm:$0xff]
    %v67 = vld [vmem:[#allocation5 + $0x40] sm:$0xff]
    %v68 = vld [vmem:[#allocation5 + $0x48] sm:$0xff]
    %v69 = vld [vmem:[#allocation5 + $0x50] sm:$0xff]
    %v70 = vld [vmem:[#allocation5 + $0x58] sm:$0xff]
    %v71 = vld [vmem:[#allocation5 + $0x60] sm:$0xff]
    %v72 = vld [vmem:[#allocation5 + $0x68] sm:$0xff]
    %v73 = vld [vmem:[#allocation5 + $0x70] sm:$0xff]
    %v74 = vld [vmem:[#allocation5 + $0x78] sm:$0xff]
    %v77 = vunpack.c.l.b16 %v57
    %v78 = vunpack.c.l.b16 %v58
    %v79 = vpack.c.b16 %v78, %v77
    %v97 = vunpack.c.l.b16 %v59
    %v98 = vunpack.c.h.b16 %v59
    %v99 = vunpack.c.l.b16 %v60
    %v100 = vunpack.c.h.b16 %v60
    %v101 = vunpack.c.l.b16 %v61
    %v102 = vunpack.c.h.b16 %v61
    %v103 = vunpack.c.l.b16 %v62
    %v104 = vunpack.c.h.b16 %v62
    %v105 = vunpack.c.l.b16 %v63
    %v106 = vunpack.c.h.b16 %v63
    %v107 = vunpack.c.l.b16 %v64
    %v108 = vunpack.c.h.b16 %v64
    %v109 = vunpack.c.l.b16 %v65
    %v110 = vunpack.c.h.b16 %v65
    %v111 = vunpack.c.l.b16 %v66
    %v112 = vunpack.c.h.b16 %v66
    %v113 = vunpack.c.l.b16 %v67
    %v114 = vunpack.c.h.b16 %v67
    %v115 = vunpack.c.l.b16 %v68
    %v116 = vunpack.c.h.b16 %v68
    %v117 = vunpack.c.l.b16 %v69
    %v118 = vunpack.c.h.b16 %v69
    %v119 = vunpack.c.l.b16 %v70
    %v120 = vunpack.c.h.b16 %v70
    %v121 = vunpack.c.l.b16 %v71
    %v122 = vunpack.c.h.b16 %v71
    %v123 = vunpack.c.l.b16 %v72
    %v124 = vunpack.c.h.b16 %v72
    %v125 = vunpack.c.l.b16 %v73
    %v126 = vunpack.c.h.b16 %v73
    %v127 = vunpack.c.l.b16 %v74
    %v128 = vunpack.c.h.b16 %v74
    %v129 = vpack.c.b16 %v99, %v97
    %v130 = vpack.c.b16 %v100, %v98
    %v131 = vpack.c.b16 %v103, %v101
    %v132 = vpack.c.b16 %v104, %v102
    %v133 = vpack.c.b16 %v107, %v105
    %v134 = vpack.c.b16 %v108, %v106
    %v135 = vpack.c.b16 %v111, %v109
    %v136 = vpack.c.b16 %v112, %v110
    %v137 = vpack.c.b16 %v115, %v113
    %v138 = vpack.c.b16 %v116, %v114
    %v139 = vpack.c.b16 %v119, %v117
    %v140 = vpack.c.b16 %v120, %v118
    %v141 = vpack.c.b16 %v123, %v121
    %v142 = vpack.c.b16 %v124, %v122
    %v143 = vpack.c.b16 %v127, %v125
    %v144 = vpack.c.b16 %v128, %v126
    %161 = vmatprep.subr.bf16.mxu0 %v130
    %162 = vmatpush1.bf16.msra.mxu0 %v129
    %163 = vmatprep.subr.bf16.mxu0 %v132
    %164 = vmatpush1.bf16.msra.mxu0 %v131
    %165 = vmatprep.subr.bf16.mxu0 %v134
    %166 = vmatpush1.bf16.msra.mxu0 %v133
    %167 = vmatprep.subr.bf16.mxu0 %v136
    %168 = vmatpush1.bf16.msra.mxu0 %v135
    %169 = vmatprep.subr.bf16.mxu0 %v138
    %170 = vmatpush1.bf16.msra.mxu0 %v137
    %171 = vmatprep.subr.bf16.mxu0 %v140
    %172 = vmatpush1.bf16.msra.mxu0 %v139
    %173 = vmatprep.subr.bf16.mxu0 %v142
    %174 = vmatpush1.bf16.msra.mxu0 %v141
    %175 = vmatprep.subr.bf16.mxu0 %v144
    %176 = vmatpush1.bf16.msra.mxu0 %v143
    %177 = vmatprep.subr.bf16.mxu0 0
    %178 = vmatpush1.bf16.msra.mxu0 0
    %179 = vmatprep.subr.bf16.mxu0 0
    %180 = vmatpush1.bf16.msra.mxu0 0
    %181 = vmatprep.subr.bf16.mxu0 0
    %182 = vmatpush1.bf16.msra.mxu0 0
    %183 = vmatprep.subr.bf16.mxu0 0
    %184 = vmatpush1.bf16.msra.mxu0 0
    %185 = vmatprep.subr.bf16.mxu0 0
    %186 = vmatpush1.bf16.msra.mxu0 0
    %187 = vmatprep.subr.bf16.mxu0 0
    %188 = vmatpush1.bf16.msra.mxu0 0
    %189 = vmatprep.subr.bf16.mxu0 0
    %190 = vmatpush1.bf16.msra.mxu0 0
    %191 = vmatprep.subr.bf16.mxu0 0
    %192 = vmatpush1.bf16.msra.mxu0 0
    %193 = vmatprep.mubr.bf16.mxu0 0
    %194 = vmatmul.mubr.bf16.gmra.mrb[0].mxu0 %v79
    %v195 = vpop.f32.mrb[0].mxu0
    %v196 = vadd.f32 0.0, %v195
    %v197 = vpop.f32.mrb[0].mxu0
    %v198 = vadd.f32 0.0, %v197
    %v199 = vpop.f32.mrb[0].mxu0
    %v200 = vadd.f32 0.0, %v199
    %v201 = vpop.f32.mrb[0].mxu0
    %v202 = vadd.f32 0.0, %v201
    %203 = vdwg.mxu0
    %v204 = vld [vmem:[#allocation7] sm:$0xff]
    %v205 = vld [vmem:[#allocation7 + $0x8] sm:$0xff]
    %v206 = vld [vmem:[#allocation7 + $0x10] sm:$0xff]
    %v207 = vld [vmem:[#allocation7 + $0x18] sm:$0xff]
    %v208 = vld [vmem:[#allocation7 + $0x20] sm:$0xff]
    %v209 = vld [vmem:[#allocation7 + $0x28] sm:$0xff]
    %v210 = vld [vmem:[#allocation7 + $0x30] sm:$0xff]
    %v211 = vld [vmem:[#allocation7 + $0x38] sm:$0xff]
    %v212 = vld [vmem:[#allocation7 + $0x40] sm:$0xff]
    %v213 = vld [vmem:[#allocation7 + $0x48] sm:$0xff]
    %v214 = vld [vmem:[#allocation7 + $0x50] sm:$0xff]
    %v215 = vld [vmem:[#allocation7 + $0x58] sm:$0xff]
    %v216 = vld [vmem:[#allocation7 + $0x60] sm:$0xff]
    %v217 = vld [vmem:[#allocation7 + $0x68] sm:$0xff]
    %v218 = vld [vmem:[#allocation7 + $0x70] sm:$0xff]
    %v219 = vld [vmem:[#allocation7 + $0x78] sm:$0xff]
    %v236 = vunpack.c.l.b16 %v204
    %v237 = vunpack.c.h.b16 %v204
    %v238 = vunpack.c.l.b16 %v205
    %v239 = vunpack.c.h.b16 %v205
    %v240 = vunpack.c.l.b16 %v206
    %v241 = vunpack.c.h.b16 %v206
    %v242 = vunpack.c.l.b16 %v207
    %v243 = vunpack.c.h.b16 %v207
    %v244 = vunpack.c.l.b16 %v208
    %v245 = vunpack.c.h.b16 %v208
    %v246 = vunpack.c.l.b16 %v209
    %v247 = vunpack.c.h.b16 %v209
    %v248 = vunpack.c.l.b16 %v210
    %v249 = vunpack.c.h.b16 %v210
    %v250 = vunpack.c.l.b16 %v211
    %v251 = vunpack.c.h.b16 %v211
    %v252 = vunpack.c.l.b16 %v212
    %v253 = vunpack.c.h.b16 %v212
    %v254 = vunpack.c.l.b16 %v213
    %v255 = vunpack.c.h.b16 %v213
    %v256 = vunpack.c.l.b16 %v214
    %v257 = vunpack.c.h.b16 %v214
    %v258 = vunpack.c.l.b16 %v215
    %v259 = vunpack.c.h.b16 %v215
    %v260 = vunpack.c.l.b16 %v216
    %v261 = vunpack.c.h.b16 %v216
    %v262 = vunpack.c.l.b16 %v217
    %v263 = vunpack.c.h.b16 %v217
    %v264 = vunpack.c.l.b16 %v218
    %v265 = vunpack.c.h.b16 %v218
    %v266 = vunpack.c.l.b16 %v219
    %v267 = vunpack.c.h.b16 %v219
    %v268 = vpack.c.b16 %v238, %v236
    %v269 = vpack.c.b16 %v239, %v237
    %v270 = vpack.c.b16 %v242, %v240
    %v271 = vpack.c.b16 %v243, %v241
    %v272 = vpack.c.b16 %v246, %v244
    %v273 = vpack.c.b16 %v247, %v245
    %v274 = vpack.c.b16 %v250, %v248
    %v275 = vpack.c.b16 %v251, %v249
    %v276 = vpack.c.b16 %v254, %v252
    %v277 = vpack.c.b16 %v255, %v253
    %v278 = vpack.c.b16 %v258, %v256
    %v279 = vpack.c.b16 %v259, %v257
    %v280 = vpack.c.b16 %v262, %v260
    %v281 = vpack.c.b16 %v263, %v261
    %v282 = vpack.c.b16 %v266, %v264
    %v283 = vpack.c.b16 %v267, %v265
    %300 = vmatprep.subr.bf16.mxu0 %v269
    %301 = vmatpush1.bf16.msra.mxu0 %v268
    %302 = vmatprep.subr.bf16.mxu0 %v271
    %303 = vmatpush1.bf16.msra.mxu0 %v270
    %304 = vmatprep.subr.bf16.mxu0 %v273
    %305 = vmatpush1.bf16.msra.mxu0 %v272
    %306 = vmatprep.subr.bf16.mxu0 %v275
    %307 = vmatpush1.bf16.msra.mxu0 %v274
    %308 = vmatprep.subr.bf16.mxu0 %v277
    %309 = vmatpush1.bf16.msra.mxu0 %v276
    %310 = vmatprep.subr.bf16.mxu0 %v279
    %311 = vmatpush1.bf16.msra.mxu0 %v278
    %312 = vmatprep.subr.bf16.mxu0 %v281
    %313 = vmatpush1.bf16.msra.mxu0 %v280
    %314 = vmatprep.subr.bf16.mxu0 %v283
    %315 = vmatpush1.bf16.msra.mxu0 %v282
    %316 = vmatprep.subr.bf16.mxu0 0
    %317 = vmatpush1.bf16.msra.mxu0 0
    %318 = vmatprep.subr.bf16.mxu0 0
    %319 = vmatpush1.bf16.msra.mxu0 0
    %320 = vmatprep.subr.bf16.mxu0 0
    %321 = vmatpush1.bf16.msra.mxu0 0
    %322 = vmatprep.subr.bf16.mxu0 0
    %323 = vmatpush1.bf16.msra.mxu0 0
    %324 = vmatprep.subr.bf16.mxu0 0
    %325 = vmatpush1.bf16.msra.mxu0 0
    %326 = vmatprep.subr.bf16.mxu0 0
    %327 = vmatpush1.bf16.msra.mxu0 0
    %328 = vmatprep.subr.bf16.mxu0 0
    %329 = vmatpush1.bf16.msra.mxu0 0
    %330 = vmatprep.subr.bf16.mxu0 0
    %331 = vmatpush1.bf16.msra.mxu0 0
    %332 = vmatprep.mubr.bf16.mxu0 0
    %333 = vmatmul.mubr.bf16.gmra.mrb[0].mxu0 %v79
    %v334 = vpop.f32.mrb[0].mxu0
    %v335 = vadd.f32 0.0, %v334
    %v336 = vpop.f32.mrb[0].mxu0
    %v337 = vadd.f32 0.0, %v336
    %v338 = vpop.f32.mrb[0].mxu0
    %v339 = vadd.f32 0.0, %v338
    %v340 = vpop.f32.mrb[0].mxu0
    %v341 = vadd.f32 0.0, %v340
    %342 = vdwg.mxu0
    %v343 = vxor.u32 %v196, 2147483648
    %v344 = vxor.u32 %v198, 2147483648
    %v345 = vxor.u32 %v200, 2147483648
    %v346 = vxor.u32 %v202, 2147483648
    %v347 = vmul.f32 %v343, 1.442695
    %v348 = vpow.pop %v347
    %v349 = vmul.f32 %v344, 1.442695
    %v350 = vpow.pop %v349
    %v351 = vmul.f32 %v345, 1.442695
    %v352 = vpow.pop %v351
    %v353 = vmul.f32 %v346, 1.442695
    %v354 = vpow.pop %v353
    %v355 = vadd.f32 %v348, 1.0
    %v356 = vadd.f32 %v350, 1.0
    %v357 = vadd.f32 %v352, 1.0
    %v358 = vadd.f32 %v354, 1.0
    %v359 = vrcp.pop %v355
    %v360 = vmul.f32 1.0, %v359
    %v361 = vrcp.pop %v356
    %v362 = vmul.f32 1.0, %v361
    %v363 = vrcp.pop %v357
    %v364 = vmul.f32 1.0, %v363
    %v365 = vrcp.pop %v358
    %v366 = vmul.f32 1.0, %v365
    %v367 = vmul.f32 %v196, %v360
    %v368 = vmul.f32 %v198, %v362
    %v369 = vmul.f32 %v200, %v364
    %v370 = vmul.f32 %v202, %v366
    %v371 = vmul.f32 %v367, %v335
    %v372 = vmul.f32 %v368, %v337
    %v373 = vmul.f32 %v369, %v339
    %v374 = vmul.f32 %v370, %v341
    %v375 = vpack.c.bf16 %v373, %v371
    %v376 = vpack.c.bf16 %v374, %v372
    %v379 = vunpack.c.l.b16 %v375
    %v380 = vunpack.c.l.b16 %v376
    %v381 = vunpack.c.h.b16 %v375
    %v382 = vunpack.c.h.b16 %v376
    %v383 = vpack.c.b16 %v380, %v379
    %v384 = vpack.c.b16 %v382, %v381
    %387 = vst [vmem:[#allocation8] sm:$0xff] %v383
    %388 = vst [vmem:[#allocation8 + $0x8] sm:$0xff] %v384
    // Predicated region
    $region26: #{tpu_custom_call.1} parent=1 // pred_check
      _
    $region27: #{tpu_custom_call.1} parent=1 // pred_check_branch
      %390 = sbr.rel (0) target = $region29
    $region28: #{tpu_custom_call.1} parent=1 // pred_region
      %s392 = ssub.s32 256, 256
      %393 = vsyncadd [#allocation4], %s392
      %s394 = sshll.u32 [#allocation8], 4
      %s395 = int_to_ptr.vmem [resolvable:$true] %s394
      %400 = dma.vmem_to_hbm [thread:$0]  %s395, 256, %s3, [#allocation4], 128, 128, 8
    $region29: #{tpu_custom_call.1} parent=1 // pred_fallthru
      _
    // Predicated region
    $region30: #{tpu_custom_call.1} parent=1 // pred_check
      _
    $region31: #{tpu_custom_call.1} parent=1 // pred_check_branch
      %402 = sbr.rel (0) target = $region33
    $region32: #{tpu_custom_call.1} parent=1 // pred_region
      %403 = dma.done [#allocation4], 256
    $region33: #{tpu_custom_call.1} parent=1 // pred_fallthru
      _
    %404 = vsyncpa [#allocation3], 1
    %405 = vsyncpa [#allocation6], 1
    %406 = vsyncpa [#allocation4], 1

</llo_original>
